<compile_context>
chip_gen: v7x
topology: tpu7x:2x2x1
jax: 0.10.0
libtpu: 0.0.40
codegen_flags: <defaults>
</compile_context>

<pallas_src>
import jax
import jax.numpy as jnp
from jax.experimental import pallas as pl
from jax.experimental.pallas import tpu as pltpu

IN_FEATURES = 500
OUT_FEATURES = 10
PAD_OUT = 128            # lane-dense width used for the MXU matmul / VPU bias add
DEFAULT_TILE_B = 2048    # ~8.5 MiB double-buffered: fits default scoped VMEM everywhere


def lenet_classifier_kernel(feat_ref, w_ref, b_ref, out_ref):
    # feat_ref: (tile_b, 500) f32   w_ref: (500, 128) bf16 (padded, VMEM-resident)
    # b_ref:    (1, 128)     f32    out_ref: (tile_b, 10) f32
    x = jnp.maximum(feat_ref[...], 0.0).astype(jnp.bfloat16)   # ReLU; dropout == identity (eval)
    y = jnp.dot(x, w_ref[...], preferred_element_type=jnp.float32) + b_ref[...]
    out_ref[...] = y[:, :OUT_FEATURES].astype(out_ref.dtype)   # narrow writeback (40 B/row)


def prepare_classifier_params(weight, bias):
    """weight: [10, 500] (PyTorch layout), bias: [10].

    Returns (w_pad, b_pad): lane-major (500, 128) bf16 weight and (1, 128) f32 bias,
    padded columns zero. Call once outside the hot path (no per-call transpose/pad).
    """
    w_pad = jnp.zeros((IN_FEATURES, PAD_OUT), dtype=jnp.float32)
    w_pad = w_pad.at[:, :OUT_FEATURES].set(weight.astype(jnp.float32).T)
    w_pad = w_pad.astype(jnp.bfloat16)            # bf16 MXU operands, f32 accumulation
    b_pad = jnp.zeros((1, PAD_OUT), dtype=jnp.float32)
    b_pad = b_pad.at[:, :OUT_FEATURES].set(bias.astype(jnp.float32))
    return w_pad, b_pad


def _choose_tile_b(B, tile_b):
    # Guarantee >=2 grid steps when possible so "parallel" semantics can shard
    # across both v7x TensorCores; keep the second-to-last block dim a multiple of 8.
    if B <= 8:
        return B                        # single full-array block (legal: block == full dims)
    half = -(-B // 2)                   # cdiv(B, 2)
    half = ((half + 7) // 8) * 8        # round up to a sublane multiple
    return min(tile_b, half)


def lenet_classifier_forward(feat, w_pad, b_pad, *, tile_b=DEFAULT_TILE_B):
    """feat: [B, 500] f32; (w_pad, b_pad) from prepare_classifier_params."""
    # TODO(synk): biggest remaining lever is interface-level: accept bf16 feat or fuse
    # this head into the producer of feat so feat never round-trips HBM.
    B = feat.shape[0]
    tile_b = _choose_tile_b(B, tile_b)
    grid = (pl.cdiv(B, tile_b),)

    cost = pl.CostEstimate(
        flops=2 * B * IN_FEATURES * PAD_OUT,            # MXU computes the padded 128-wide matmul
        transcendentals=0,
        bytes_accessed=(B * IN_FEATURES * 4             # feat read (f32)
                        + B * OUT_FEATURES * 4          # narrow output write
                        + IN_FEATURES * PAD_OUT * 2     # bf16 weight read
                        + PAD_OUT * 4),                 # bias read
    )

    return pl.pallas_call(
        lenet_classifier_kernel,
        out_shape=jax.ShapeDtypeStruct((B, OUT_FEATURES), feat.dtype),
        grid=grid,
        in_specs=[
            pl.BlockSpec((tile_b, IN_FEATURES), lambda i: (i, 0)),
            pl.BlockSpec((IN_FEATURES, PAD_OUT), lambda i: (0, 0)),  # VMEM-resident
            pl.BlockSpec((1, PAD_OUT), lambda i: (0, 0)),            # VMEM-resident
        ],
        out_specs=pl.BlockSpec((tile_b, OUT_FEATURES), lambda i: (i, 0)),
        compiler_params=pltpu.CompilerParams(
            dimension_semantics=("parallel",)),
        cost_estimate=cost,
    )(feat, w_pad, b_pad)


def reference_forward(feat, weight, bias):
    return jnp.maximum(feat, 0.0) @ weight.T + bias


def reference_forward_bf16(feat, weight, bias):
    # Mirrors what the kernel's MXU computes: bf16 operands, f32 accumulation.
    x = jnp.maximum(feat, 0.0).astype(jnp.bfloat16)
    w = weight.astype(jnp.bfloat16)
    return jnp.dot(x, w.T, preferred_element_type=jnp.float32) + bias


if __name__ == "__main__":
    key = jax.random.PRNGKey(0)
    k_feat, k_w, k_b = jax.random.split(key, 3)

    B = 16                              # small batch, still exercises a 2-step grid
    feat = jax.random.normal(k_feat, (B, IN_FEATURES), dtype=jnp.float32)

    # Deterministic init matching nn.Linear(500, 10): U(-1/sqrt(500), 1/sqrt(500))
    bound = 1.0 / (IN_FEATURES ** 0.5)
    weight = jax.random.uniform(k_w, (OUT_FEATURES, IN_FEATURES),
                                minval=-bound, maxval=bound, dtype=jnp.float32)
    bias = jax.random.uniform(k_b, (OUT_FEATURES,),
                              minval=-bound, maxval=bound, dtype=jnp.float32)

    w_pad, b_pad = prepare_classifier_params(weight, bias)

    out = lenet_classifier_forward(feat, w_pad, b_pad)
    out = jax.block_until_ready(out)

    ref_f32 = reference_forward(feat, weight, bias)
    ref_bf16 = reference_forward_bf16(feat, weight, bias)

    assert out.shape == (B, OUT_FEATURES)
    assert out.dtype == jnp.float32
    # Tight check against what the MXU actually computes (bf16 operands, f32 accum).
    assert jnp.allclose(out, ref_bf16, atol=1e-3, rtol=1e-3)
    # Loose check against the full-f32 reference (bf16 operand rounding only).
    assert jnp.allclose(out, ref_f32, atol=3e-2, rtol=3e-2)

    print("KERNEL_OK")
</pallas_src>

<mosaic_0001>
module attributes {stable_mosaic.version = 11 : i64} {
  func.func @lenet_classifier_kernel(%arg0: i32, %arg1: memref<8x500xf32, #tpu.memory_space<vmem>>, %arg2: memref<500x128xbf16, #tpu.memory_space<vmem>>, %arg3: memref<1x128xf32, #tpu.memory_space<vmem>>, %arg4: memref<8x10xf32, #tpu.memory_space<vmem>>) attributes {dimension_semantics = [#tpu.dimension_semantics<parallel>], iteration_bounds = array<i64: 2>, scalar_prefetch = 0 : i64, scratch_operands = 0 : i64, tpu.core_type = #tpu.core_type<tc>, window_params = [{transform_indices = @transform_0, window_bounds = array<i64: 8, 500>}, {pipeline_mode = #tpu.pipeline_mode<synchronous>, transform_indices = @transform_1, window_bounds = array<i64: 500, 128>}, {pipeline_mode = #tpu.pipeline_mode<synchronous>, transform_indices = @transform_2, window_bounds = array<i64: 1, 128>}, {transform_indices = @transform_3, window_bounds = array<i64: 8, 10>}]} {
    %c0 = arith.constant 0 : index
    %c0_0 = arith.constant 0 : index
    %0 = vector.load %arg1[%c0, %c0_0] : memref<8x500xf32, #tpu.memory_space<vmem>>, vector<8x500xf32>
    %cst = arith.constant 0.000000e+00 : f32
    %1 = vector.broadcast %cst : f32 to vector<8x500xf32>
    %2 = arith.maximumf %0, %1 : vector<8x500xf32>
    %3 = arith.truncf %2 : vector<8x500xf32> to vector<8x500xbf16>
    %c0_1 = arith.constant 0 : index
    %c0_2 = arith.constant 0 : index
    %4 = vector.load %arg2[%c0_1, %c0_2] : memref<500x128xbf16, #tpu.memory_space<vmem>>, vector<500x128xbf16>
    %cst_3 = arith.constant dense<0.000000e+00> : vector<8x128xf32>
    %5 = tpu.matmul %3, %4, %cst_3 {dimension_numbers = #tpu.dot_dimension_numbers<[1], [0], [0], [1], [0, 0, 1, 1], [], []>} : vector<8x500xbf16>, vector<500x128xbf16>, vector<8x128xf32> -> vector<8x128xf32>
    %c0_4 = arith.constant 0 : index
    %c0_5 = arith.constant 0 : index
    %6 = vector.load %arg3[%c0_4, %c0_5] : memref<1x128xf32, #tpu.memory_space<vmem>>, vector<1x128xf32>
    %7 = vector.broadcast %6 : vector<1x128xf32> to vector<8x128xf32>
    %8 = arith.addf %5, %7 : vector<8x128xf32>
    %9 = vector.extract_strided_slice %8 {offsets = [0, 0], sizes = [8, 10], strides = [1, 1]} : vector<8x128xf32> to vector<8x10xf32>
    %c0_6 = arith.constant 0 : index
    %c0_7 = arith.constant 0 : index
    %10 = vector.load %arg4[%c0_6, %c0_7] : memref<8x10xf32, #tpu.memory_space<vmem>>, vector<8x10xf32>
    tpu.vector_store %arg4[%c0_6, %c0_7], %9 {strides = array<i32>} : memref<8x10xf32, #tpu.memory_space<vmem>>, vector<8x10xf32>,
    return
  }
  func.func @transform_0(%arg0: i32) -> (i32, i32) {
    %c0_i32 = arith.constant 0 : i32
    %c0_i32_0 = arith.constant 0 : i32
    return %arg0, %c0_i32 : i32, i32
  }
  func.func @transform_1(%arg0: i32) -> (i32, i32) {
    %c0_i32 = arith.constant 0 : i32
    %c0_i32_0 = arith.constant 0 : i32
    %c0_i32_1 = arith.constant 0 : i32
    return %c0_i32, %c0_i32_0 : i32, i32
  }
  func.func @transform_2(%arg0: i32) -> (i32, i32) {
    %c0_i32 = arith.constant 0 : i32
    %c0_i32_0 = arith.constant 0 : i32
    %c0_i32_1 = arith.constant 0 : i32
    return %c0_i32, %c0_i32_0 : i32, i32
  }
  func.func @transform_3(%arg0: i32) -> (i32, i32) {
    %c0_i32 = arith.constant 0 : i32
    %c0_i32_0 = arith.constant 0 : i32
    return %arg0, %c0_i32 : i32, i32
  }
}

</mosaic_0001>

<llo_original>
// kernel: tpu_custom_call.1
$region0: #{tpu_custom_call.1}
  #allocation0 [shape = 'u32[]', space=smem, size = 0x4, offset = 0x4, fixed_abs, tag = 'smem constant byte address 0x4 - core index']
  #allocation1 [shape = 'u32[144,128]{1,0:T(1,128)}', space=vmem, size = 0x12000, scoped, tag = 'internal scratch']
  %s0 = inlined_call_operand.hbm [shape: f32[16,500], index: 0, kind: input, shape index: {}]
  %s1 = inlined_call_operand.hbm [shape: bf16[500,128], index: 1, kind: input, shape index: {}]
  %s2 = inlined_call_operand.vmem [shape: f32[1,128], index: 2, kind: input, shape index: {}]
  %s3 = inlined_call_operand.hbm [shape: f32[16,10], index: 3, kind: output, shape index: {}]
  %s4 = sld [smem:[#allocation0]]
  $region53: #{tpu_custom_call.1} parent=0
    _
  %s6 = ssub.s32 1, %s4
  %s7 = scalar_select 0, %s6, %s4
  $region1: #{tpu_custom_call.1} parent=0
    #allocation2 [shape = 'u8[32768]{0}', space=vmem, size = 0x8000, scoped, tag = 'input window, operand 0']
    #allocation3 [shape = 's32[2]{0}', space=sflag, size = 0x8, scoped, tag = 'scoped memory for tpu_custom_call.1']
    #allocation4 [shape = 's32[2]{0}', space=sflag, size = 0x8, scoped, tag = 'scoped memory for tpu_custom_call.1']
    #allocation5 [shape = 'u8[129024]{0}', space=vmem, size = 0x1f800, scoped, tag = 'input window, operand 1, single buffered']
    #allocation6 [shape = 's32[1]{0}', space=sflag, size = 0x4, scoped, tag = 'scoped memory for tpu_custom_call.1']
    #allocation7 [shape = 'u8[8192]{0}', space=vmem, size = 0x2000, scoped, tag = 'output window, operand 0']
    %8 = vsyncpa [#allocation3], 0
    %s9 = scalar_lea.sflag [#allocation3], 1
    %10 = vsyncpa %s9, 0
    %11 = vsyncpa [#allocation6], 0
    %12 = vsyncpa [#allocation4], 0
    %s13 = scalar_lea.sflag [#allocation4], 1
    %14 = vsyncpa %s13, 0
    loop: start=0, step=1, limit=4
    $region2: #{tpu_custom_call.1} parent=1 // loop_pre_header
      _
    $region3: #{tpu_custom_call.1} parent=1 // loop_header
      %s16 = sphi 0, %s20
      %p17 = scmp.ge.s32.totalorder %s16, 4
      %s26 = sphi 0, %s28
      %s29 = sphi 0, %s26
      %s30 = sphi 0, %s29
      %s46 = sphi 0, %s30
      %s50 = sphi 0, %s50
      %s52 = sphi 0, %s50
      %s53 = sphi 0, %s52
      %s67 = sphi 0, %s53
      %s71 = sphi 0, %s71
      %s73 = sphi 0, %s71
      %s74 = sphi 0, %s73
      %s88 = sphi 0, %s74
      %s94 = sphi 0, %s96
      %s97 = sphi 0, %s94
      %s98 = sphi 0, %s97
      %s114 = sphi 0, %s98
    $region4: #{tpu_custom_call.1} parent=1 // loop_header_branch
      %19 = sbr.rel (%p17) target = $region8
    $region5: #{tpu_custom_call.1} parent=1 // loop_body
      %s21 = ssub.s32 %s16, 1
      %s22 = ssub.s32 %s16, 2
      %s23 = sadd.s32 %s16, 1
      %s24 = ssub.s32 %s16, %s23
      %p25 = scmp.eq.s32.totalorder %s24, 0
      %s27 = sadd.s32 %s26, 1
      %s28 = scalar_select %p25, %s26, %s27
      %p31 = pneg %p25
      %p32 = scmp.eq.s32.totalorder %s16, 1
      %p33 = por %p31, %p32
      %p34 = scmp.ne.s32.totalorder %s26, %s29
      %p35 = scmp.eq.s32.totalorder %s16, 0
      %p36 = por %p34, %p35
      %p37 = scmp.ne.s32.totalorder %s26, %s29
      %p38 = scmp.eq.s32.totalorder %s21, 1
      %p39 = por %p37, %p38
      %p40 = scmp.ne.s32.totalorder %s29, %s30
      %p41 = scmp.eq.s32.totalorder %s21, 0
      %p42 = por %p40, %p41
      %p43 = scmp.ne.s32.totalorder %s29, %s30
      %p44 = scmp.eq.s32.totalorder %s22, 1
      %p45 = por %p43, %p44
      %p47 = scmp.ne.s32.totalorder %s30, %s46
      %p48 = scmp.eq.s32.totalorder %s22, 0
      %p49 = por %p47, %p48
      %s51 = sadd.s32 %s50, 1
      %p54 = scmp.eq.s32.totalorder %s16, 1
      %p55 = scmp.ne.s32.totalorder %s50, %s52
      %p56 = scmp.eq.s32.totalorder %s16, 0
      %p57 = por %p55, %p56
      %p58 = scmp.ne.s32.totalorder %s50, %s52
      %p59 = scmp.eq.s32.totalorder %s21, 1
      %p60 = por %p58, %p59
      %p61 = scmp.ne.s32.totalorder %s52, %s53
      %p62 = scmp.eq.s32.totalorder %s21, 0
      %p63 = por %p61, %p62
      %p64 = scmp.ne.s32.totalorder %s52, %s53
      %p65 = scmp.eq.s32.totalorder %s22, 1
      %p66 = por %p64, %p65
      %p68 = scmp.ne.s32.totalorder %s53, %s67
      %p69 = scmp.eq.s32.totalorder %s22, 0
      %p70 = por %p68, %p69
      %s72 = sadd.s32 %s71, 1
      %p75 = scmp.eq.s32.totalorder %s16, 1
      %p76 = scmp.ne.s32.totalorder %s71, %s73
      %p77 = scmp.eq.s32.totalorder %s16, 0
      %p78 = por %p76, %p77
      %p79 = scmp.ne.s32.totalorder %s71, %s73
      %p80 = scmp.eq.s32.totalorder %s21, 1
      %p81 = por %p79, %p80
      %p82 = scmp.ne.s32.totalorder %s73, %s74
      %p83 = scmp.eq.s32.totalorder %s21, 0
      %p84 = por %p82, %p83
      %p85 = scmp.ne.s32.totalorder %s73, %s74
      %p86 = scmp.eq.s32.totalorder %s22, 1
      %p87 = por %p85, %p86
      %p89 = scmp.ne.s32.totalorder %s74, %s88
      %p90 = scmp.eq.s32.totalorder %s22, 0
      %p91 = por %p89, %p90
      %s92 = ssub.s32 %s16, %s23
      %p93 = scmp.eq.s32.totalorder %s92, 0
      %s95 = sadd.s32 %s94, 1
      %s96 = scalar_select %p93, %s94, %s95
      %p99 = pneg %p93
      %p100 = scmp.eq.s32.totalorder %s16, 1
      %p101 = por %p99, %p100
      %p102 = scmp.ne.s32.totalorder %s94, %s97
      %p103 = scmp.eq.s32.totalorder %s16, 0
      %p104 = por %p102, %p103
      %p105 = scmp.ne.s32.totalorder %s94, %s97
      %p106 = scmp.eq.s32.totalorder %s21, 1
      %p107 = por %p105, %p106
      %p108 = scmp.ne.s32.totalorder %s97, %s98
      %p109 = scmp.eq.s32.totalorder %s21, 0
      %p110 = por %p108, %p109
      %p111 = scmp.ne.s32.totalorder %s97, %s98
      %p112 = scmp.eq.s32.totalorder %s22, 1
      %p113 = por %p111, %p112
      %p115 = scmp.ne.s32.totalorder %s98, %s114
      %p116 = scmp.eq.s32.totalorder %s22, 0
      %p117 = por %p115, %p116
      %p118 = scmp.le.s32.totalorder 1, %s16
      %p119 = scmp.lt.s32.totalorder %s16, 3
      %p120 = pnand %p118, %p119
      %p121 = pneg %p120
      // Predicated region
      $region9: #{tpu_custom_call.1} parent=5 // pred_check
        _
      $region10: #{tpu_custom_call.1} parent=5 // pred_check_branch
        %123 = sbr.rel (%p120) target = $region12
      $region11: #{tpu_custom_call.1} parent=5 // pred_region
        %s124 = ssub.s32 %s16, 1
        // Predicated region
        $region13: #{tpu_custom_call.1} parent=11 // pred_check
          %p125 = pneg %p63
        $region14: #{tpu_custom_call.1} parent=11 // pred_check_branch
          %127 = sbr.rel (%p125) target = $region16
        $region15: #{tpu_custom_call.1} parent=11 // pred_region
          %s129 = ssub.s32 4032, 4032
          %130 = vsyncadd [#allocation6], %s129
          %s131 = sshll.u32 [#allocation5], 4
          %s132 = int_to_ptr.vmem [resolvable:$true] %s131
          %137 = dma.hbm_to_vmem [thread:$0]  %s1, 4032, %s132, [#allocation6], 64, 64, 4
        $region16: #{tpu_custom_call.1} parent=11 // pred_fallthru
          _
        // Predicated region
        $region17: #{tpu_custom_call.1} parent=11 // pred_check
          %p138 = pneg %p84
        $region18: #{tpu_custom_call.1} parent=11 // pred_check_branch
          %140 = sbr.rel (%p138) target = $region20
        $region19: #{tpu_custom_call.1} parent=11 // pred_region
          _
        $region20: #{tpu_custom_call.1} parent=11 // pred_fallthru
          _
      $region12: #{tpu_custom_call.1} parent=5 // pred_fallthru
        _
      %p141 = scmp.lt.s32.totalorder %s16, 2
      // Predicated region
      $region21: #{tpu_custom_call.1} parent=5 // pred_check
        %p142 = pneg %p141
      $region22: #{tpu_custom_call.1} parent=5 // pred_check_branch
        %144 = sbr.rel (%p142) target = $region24
      $region23: #{tpu_custom_call.1} parent=5 // pred_region
        // Predicated region
        $region25: #{tpu_custom_call.1} parent=23 // pred_check
          %p145 = pneg %p36
        $region26: #{tpu_custom_call.1} parent=23 // pred_check_branch
          %147 = sbr.rel (%p145) target = $region28
        $region27: #{tpu_custom_call.1} parent=23 // pred_region
          %s148 = sand.u32 %s26, 1
          %s149 = scalar_lea.sflag [#allocation3], %s148
          %s150 = sand.u32 %s26, 1
          %s151 = smul.addr %s150, 32
          %s152 = scalar_lea.vmem [#allocation2], %s151
          %s154 = ssub.s32 512, 512
          %155 = vsyncadd %s149, %s154
          %s156 = smul.addr %s16, 4
          %s157 = smul.addr %s156, 128
          %s158 = scalar_lea.hbm %s0, %s157
          %s160 = sshll.u32 %s152, 4
          %s161 = int_to_ptr.vmem [resolvable:$true] %s160
          %163 = dma.hbm_to_vmem [thread:$0]  %s158, 512, %s161, %s149
        $region28: #{tpu_custom_call.1} parent=23 // pred_fallthru
          _
      $region24: #{tpu_custom_call.1} parent=5 // pred_fallthru
        _
      %p164 = scmp.le.s32.totalorder 1, %s16
      %p165 = scmp.lt.s32.totalorder %s16, 3
      %p166 = pnand %p164, %p165
      %p167 = pneg %p166
      // Predicated region
      $region29: #{tpu_custom_call.1} parent=5 // pred_check
        _
      $region30: #{tpu_custom_call.1} parent=5 // pred_check_branch
        %169 = sbr.rel (%p166) target = $region32
      $region31: #{tpu_custom_call.1} parent=5 // pred_region
        %s170 = ssub.s32 %s16, 1
        %s171 = sand.u32 %s29, 1
        %s172 = scalar_lea.sflag [#allocation3], %s171
        %s173 = sand.u32 %s29, 1
        %s174 = smul.addr %s173, 32
        %s175 = scalar_lea.vmem [#allocation2], %s174
        // Predicated region
        $region33: #{tpu_custom_call.1} parent=31 // pred_check
          %p176 = pneg %p42
        $region34: #{tpu_custom_call.1} parent=31 // pred_check_branch
          %178 = sbr.rel (%p176) target = $region36
        $region35: #{tpu_custom_call.1} parent=31 // pred_region
          %179 = dma.done %s172, 512
        $region36: #{tpu_custom_call.1} parent=31 // pred_fallthru
          _
        // Predicated region
        $region37: #{tpu_custom_call.1} parent=31 // pred_check
          %p180 = pneg %p63
        $region38: #{tpu_custom_call.1} parent=31 // pred_check_branch
          %182 = sbr.rel (%p180) target = $region40
        $region39: #{tpu_custom_call.1} parent=31 // pred_region
          %183 = dma.done [#allocation6], 4032
        $region40: #{tpu_custom_call.1} parent=31 // pred_fallthru
          _
        %s184 = sand.u32 %s29, 1
        %s185 = scalar_lea.sflag [#allocation3], %s184
        %s186 = sand.u32 %s29, 1
        %s187 = smul.addr %s186, 32
        %s188 = scalar_lea.vmem [#allocation2], %s187
        %p189 = pneg %p42
        %p190 = pneg %p39
        %p191 = pneg %p63
        %p192 = pneg %p60
        %p193 = pneg %p84
        %p194 = pneg %p81
        %p195 = pneg %p110
        %p196 = pneg %p107
        %s197 = sand.u32 %s97, 1
        %s198 = scalar_lea.sflag [#allocation4], %s197
        %s199 = sand.u32 %s97, 1
        %s200 = smul.addr %s199, 8
        %s201 = scalar_lea.vmem [#allocation7], %s200
        %v203 = vld [vmem:[%s175] sm:$0xff]
        %v204 = vld [vmem:[%s175 + $0x8] sm:$0xff]
        %v205 = vld [vmem:[%s175 + $0x10] sm:$0xff]
        %v206 = vld [vmem:[%s175 + $0x18] sm:$0xff]
        %v207 = vmax.f32 %v203, 0.0
        %v208 = vmax.f32 %v204, 0.0
        %v209 = vmax.f32 %v205, 0.0
        %v210 = vmax.f32 %v206, 0.0
        %v211 = vpack.c.bf16 %v207, %v207
        %v212 = vpack.c.bf16 %v208, %v208
        %v213 = vpack.c.bf16 %v209, %v209
        %v214 = vpack.c.bf16 %v210, %v210
        %v215 = vld [vmem:[#allocation5] sm:$0xf]
        %v216 = vld [vmem:[#allocation5 + $0x4] sm:$0xf]
        %v217 = vld [vmem:[#allocation5 + $0x8] sm:$0xf]
        %v218 = vld [vmem:[#allocation5 + $0xc] sm:$0xf]
        %v219 = vld [vmem:[#allocation5 + $0x10] sm:$0xf]
        %v220 = vld [vmem:[#allocation5 + $0x14] sm:$0xf]
        %v221 = vld [vmem:[#allocation5 + $0x18] sm:$0xf]
        %v222 = vld [vmem:[#allocation5 + $0x1c] sm:$0xf]
        %v223 = vld [vmem:[#allocation5 + $0x20] sm:$0xf]
        %v224 = vld [vmem:[#allocation5 + $0x24] sm:$0xf]
        %v225 = vld [vmem:[#allocation5 + $0x28] sm:$0xf]
        %v226 = vld [vmem:[#allocation5 + $0x2c] sm:$0xf]
        %v227 = vld [vmem:[#allocation5 + $0x30] sm:$0xf]
        %v228 = vld [vmem:[#allocation5 + $0x34] sm:$0xf]
        %v229 = vld [vmem:[#allocation5 + $0x38] sm:$0xf]
        %v230 = vld [vmem:[#allocation5 + $0x3c] sm:$0xf]
        %v231 = vld [vmem:[#allocation5 + $0x40] sm:$0xf]
        %v232 = vld [vmem:[#allocation5 + $0x44] sm:$0xf]
        %v233 = vld [vmem:[#allocation5 + $0x48] sm:$0xf]
        %v234 = vld [vmem:[#allocation5 + $0x4c] sm:$0xf]
        %v235 = vld [vmem:[#allocation5 + $0x50] sm:$0xf]
        %v236 = vld [vmem:[#allocation5 + $0x54] sm:$0xf]
        %v237 = vld [vmem:[#allocation5 + $0x58] sm:$0xf]
        %v238 = vld [vmem:[#allocation5 + $0x5c] sm:$0xf]
        %v239 = vld [vmem:[#allocation5 + $0x60] sm:$0xf]
        %v240 = vld [vmem:[#allocation5 + $0x64] sm:$0xf]
        %v241 = vld [vmem:[#allocation5 + $0x68] sm:$0xf]
        %v242 = vld [vmem:[#allocation5 + $0x6c] sm:$0xf]
        %v243 = vld [vmem:[#allocation5 + $0x70] sm:$0xf]
        %v244 = vld [vmem:[#allocation5 + $0x74] sm:$0xf]
        %v245 = vld [vmem:[#allocation5 + $0x78] sm:$0xf]
        %v246 = vld [vmem:[#allocation5 + $0x7c] sm:$0xf]
        %v247 = vld [vmem:[#allocation5 + $0x80] sm:$0xf]
        %v248 = vld [vmem:[#allocation5 + $0x84] sm:$0xf]
        %v249 = vld [vmem:[#allocation5 + $0x88] sm:$0xf]
        %v250 = vld [vmem:[#allocation5 + $0x8c] sm:$0xf]
        %v251 = vld [vmem:[#allocation5 + $0x90] sm:$0xf]
        %v252 = vld [vmem:[#allocation5 + $0x94] sm:$0xf]
        %v253 = vld [vmem:[#allocation5 + $0x98] sm:$0xf]
        %v254 = vld [vmem:[#allocation5 + $0x9c] sm:$0xf]
        %v255 = vld [vmem:[#allocation5 + $0xa0] sm:$0xf]
        %v256 = vld [vmem:[#allocation5 + $0xa4] sm:$0xf]
        %v257 = vld [vmem:[#allocation5 + $0xa8] sm:$0xf]
        %v258 = vld [vmem:[#allocation5 + $0xac] sm:$0xf]
        %v259 = vld [vmem:[#allocation5 + $0xb0] sm:$0xf]
        %v260 = vld [vmem:[#allocation5 + $0xb4] sm:$0xf]
        %v261 = vld [vmem:[#allocation5 + $0xb8] sm:$0xf]
        %v262 = vld [vmem:[#allocation5 + $0xbc] sm:$0xf]
        %v263 = vld [vmem:[#allocation5 + $0xc0] sm:$0xf]
        %v264 = vld [vmem:[#allocation5 + $0xc4] sm:$0xf]
        %v265 = vld [vmem:[#allocation5 + $0xc8] sm:$0xf]
        %v266 = vld [vmem:[#allocation5 + $0xcc] sm:$0xf]
        %v267 = vld [vmem:[#allocation5 + $0xd0] sm:$0xf]
        %v268 = vld [vmem:[#allocation5 + $0xd4] sm:$0xf]
        %v269 = vld [vmem:[#allocation5 + $0xd8] sm:$0xf]
        %v270 = vld [vmem:[#allocation5 + $0xdc] sm:$0xf]
        %v271 = vld [vmem:[#allocation5 + $0xe0] sm:$0xf]
        %v272 = vld [vmem:[#allocation5 + $0xe4] sm:$0xf]
        %v273 = vld [vmem:[#allocation5 + $0xe8] sm:$0xf]
        %v274 = vld [vmem:[#allocation5 + $0xec] sm:$0xf]
        %v275 = vld [vmem:[#allocation5 + $0xf0] sm:$0xf]
        %v276 = vld [vmem:[#allocation5 + $0xf4] sm:$0xf]
        %v277 = vld [vmem:[#allocation5 + $0xf8] sm:$0x3]
        %v278 = vld [vmem:[%s2] sm:$0x1]
        %v280 = vlaneseq
        %v281 = vshrl.u32 %v280, 7
        %v282 = vsub.s32 0, %v281
        %v283 = vrot.slane %v278, %v282
        %v348 = vunpack.c.l.b16 %v215
        %v349 = vunpack.c.l.b16 %v216
        %v350 = vunpack.c.l.b16 %v217
        %v351 = vunpack.c.l.b16 %v218
        %v352 = vunpack.c.l.b16 %v219
        %v353 = vunpack.c.l.b16 %v220
        %v354 = vunpack.c.l.b16 %v221
        %v355 = vunpack.c.l.b16 %v222
        %v356 = vunpack.c.l.b16 %v223
        %v357 = vunpack.c.l.b16 %v224
        %v358 = vunpack.c.l.b16 %v225
        %v359 = vunpack.c.l.b16 %v226
        %v360 = vunpack.c.l.b16 %v227
        %v361 = vunpack.c.l.b16 %v228
        %v362 = vunpack.c.l.b16 %v229
        %v363 = vunpack.c.l.b16 %v230
        %v364 = vunpack.c.l.b16 %v231
        %v365 = vunpack.c.l.b16 %v232
        %v366 = vunpack.c.l.b16 %v233
        %v367 = vunpack.c.l.b16 %v234
        %v368 = vunpack.c.l.b16 %v235
        %v369 = vunpack.c.l.b16 %v236
        %v370 = vunpack.c.l.b16 %v237
        %v371 = vunpack.c.l.b16 %v238
        %v372 = vunpack.c.l.b16 %v239
        %v373 = vunpack.c.l.b16 %v240
        %v374 = vunpack.c.l.b16 %v241
        %v375 = vunpack.c.l.b16 %v242
        %v376 = vunpack.c.l.b16 %v243
        %v377 = vunpack.c.l.b16 %v244
        %v378 = vunpack.c.l.b16 %v245
        %v379 = vunpack.c.l.b16 %v246
        %v380 = vunpack.c.l.b16 %v247
        %v381 = vunpack.c.l.b16 %v248
        %v382 = vunpack.c.l.b16 %v249
        %v383 = vunpack.c.l.b16 %v250
        %v384 = vunpack.c.l.b16 %v251
        %v385 = vunpack.c.l.b16 %v252
        %v386 = vunpack.c.l.b16 %v253
        %v387 = vunpack.c.l.b16 %v254
        %v388 = vunpack.c.l.b16 %v255
        %v389 = vunpack.c.l.b16 %v256
        %v390 = vunpack.c.l.b16 %v257
        %v391 = vunpack.c.l.b16 %v258
        %v392 = vunpack.c.l.b16 %v259
        %v393 = vunpack.c.l.b16 %v260
        %v394 = vunpack.c.l.b16 %v261
        %v395 = vunpack.c.l.b16 %v262
        %v396 = vunpack.c.l.b16 %v263
        %v397 = vunpack.c.l.b16 %v264
        %v398 = vunpack.c.l.b16 %v265
        %v399 = vunpack.c.l.b16 %v266
        %v400 = vunpack.c.l.b16 %v267
        %v401 = vunpack.c.l.b16 %v268
        %v402 = vunpack.c.l.b16 %v269
        %v403 = vunpack.c.l.b16 %v270
        %v404 = vunpack.c.l.b16 %v271
        %v405 = vunpack.c.l.b16 %v272
        %v406 = vunpack.c.l.b16 %v273
        %v407 = vunpack.c.l.b16 %v274
        %v408 = vunpack.c.l.b16 %v275
        %v409 = vunpack.c.l.b16 %v276
        %v410 = vunpack.c.l.b16 %v277
        %v411 = vpack.c.b16 %v349, %v348
        %v412 = vpack.c.b16 %v351, %v350
        %v413 = vpack.c.b16 %v353, %v352
        %v414 = vpack.c.b16 %v355, %v354
        %v415 = vpack.c.b16 %v357, %v356
        %v416 = vpack.c.b16 %v359, %v358
        %v417 = vpack.c.b16 %v361, %v360
        %v418 = vpack.c.b16 %v363, %v362
        %v419 = vpack.c.b16 %v365, %v364
        %v420 = vpack.c.b16 %v367, %v366
        %v421 = vpack.c.b16 %v369, %v368
        %v422 = vpack.c.b16 %v371, %v370
        %v423 = vpack.c.b16 %v373, %v372
        %v424 = vpack.c.b16 %v375, %v374
        %v425 = vpack.c.b16 %v377, %v376
        %v426 = vpack.c.b16 %v379, %v378
        %v427 = vpack.c.b16 %v381, %v380
        %v428 = vpack.c.b16 %v383, %v382
        %v429 = vpack.c.b16 %v385, %v384
        %v430 = vpack.c.b16 %v387, %v386
        %v431 = vpack.c.b16 %v389, %v388
        %v432 = vpack.c.b16 %v391, %v390
        %v433 = vpack.c.b16 %v393, %v392
        %v434 = vpack.c.b16 %v395, %v394
        %v435 = vpack.c.b16 %v397, %v396
        %v436 = vpack.c.b16 %v399, %v398
        %v437 = vpack.c.b16 %v401, %v400
        %v438 = vpack.c.b16 %v403, %v402
        %v439 = vpack.c.b16 %v405, %v404
        %v440 = vpack.c.b16 %v407, %v406
        %v441 = vpack.c.b16 %v409, %v408
        %v442 = vpack.c.b16 %v410, %v410
        %vm474 = vcmask 949248
        %v476 = vsel %vm474, %v214, 0
        %vm478 = vcmask 1041408
        %v480 = vsel %vm478, %v442, 0
        %482 = vmatprep.subr.bf16.mxu0 0
        %483 = vmatpush1.bf16.msra.mxu0 %v411
        %484 = vmatprep.subr.bf16.mxu0 0
        %485 = vmatpush1.bf16.msra.mxu0 %v412
        %486 = vmatprep.subr.bf16.mxu0 0
        %487 = vmatpush1.bf16.msra.mxu0 %v413
        %488 = vmatprep.subr.bf16.mxu0 0
        %489 = vmatpush1.bf16.msra.mxu0 %v414
        %490 = vmatprep.subr.bf16.mxu0 0
        %491 = vmatpush1.bf16.msra.mxu0 %v415
        %492 = vmatprep.subr.bf16.mxu0 0
        %493 = vmatpush1.bf16.msra.mxu0 %v416
        %494 = vmatprep.subr.bf16.mxu0 0
        %495 = vmatpush1.bf16.msra.mxu0 %v417
        %496 = vmatprep.subr.bf16.mxu0 0
        %497 = vmatpush1.bf16.msra.mxu0 %v418
        %498 = vmatprep.subr.bf16.mxu0 0
        %499 = vmatpush1.bf16.msra.mxu0 %v419
        %500 = vmatprep.subr.bf16.mxu0 0
        %501 = vmatpush1.bf16.msra.mxu0 %v420
        %502 = vmatprep.subr.bf16.mxu0 0
        %503 = vmatpush1.bf16.msra.mxu0 %v421
        %504 = vmatprep.subr.bf16.mxu0 0
        %505 = vmatpush1.bf16.msra.mxu0 %v422
        %506 = vmatprep.subr.bf16.mxu0 0
        %507 = vmatpush1.bf16.msra.mxu0 %v423
        %508 = vmatprep.subr.bf16.mxu0 0
        %509 = vmatpush1.bf16.msra.mxu0 %v424
        %510 = vmatprep.subr.bf16.mxu0 0
        %511 = vmatpush1.bf16.msra.mxu0 %v425
        %512 = vmatprep.subr.bf16.mxu0 0
        %513 = vmatpush1.bf16.msra.mxu0 %v426
        %514 = vmatprep.mubr.bf16.mxu0 %v212
        %515 = vmatmul.mubr.bf16.gmra.mrb[0].mxu0 %v211
        %v516 = vpop.f32.mrb[0].mxu0
        %v517 = vadd.f32 %v283, %v516
        %v518 = vpop.f32.mrb[0].mxu0
        %v519 = vpop.f32.mrb[0].mxu0
        %v520 = vpop.f32.mrb[0].mxu0
        %521 = vdwg.mxu0
        %522 = vmatprep.subr.bf16.mxu0 0
        %523 = vmatpush1.bf16.msra.mxu0 %v427
        %524 = vmatprep.subr.bf16.mxu0 0
        %525 = vmatpush1.bf16.msra.mxu0 %v428
        %526 = vmatprep.subr.bf16.mxu0 0
        %527 = vmatpush1.bf16.msra.mxu0 %v429
        %528 = vmatprep.subr.bf16.mxu0 0
        %529 = vmatpush1.bf16.msra.mxu0 %v430
        %530 = vmatprep.subr.bf16.mxu0 0
        %531 = vmatpush1.bf16.msra.mxu0 %v431
        %532 = vmatprep.subr.bf16.mxu0 0
        %533 = vmatpush1.bf16.msra.mxu0 %v432
        %534 = vmatprep.subr.bf16.mxu0 0
        %535 = vmatpush1.bf16.msra.mxu0 %v433
        %536 = vmatprep.subr.bf16.mxu0 0
        %537 = vmatpush1.bf16.msra.mxu0 %v434
        %538 = vmatprep.subr.bf16.mxu0 0
        %539 = vmatpush1.bf16.msra.mxu0 %v435
        %540 = vmatprep.subr.bf16.mxu0 0
        %541 = vmatpush1.bf16.msra.mxu0 %v436
        %542 = vmatprep.subr.bf16.mxu0 0
        %543 = vmatpush1.bf16.msra.mxu0 %v437
        %544 = vmatprep.subr.bf16.mxu0 0
        %545 = vmatpush1.bf16.msra.mxu0 %v438
        %546 = vmatprep.subr.bf16.mxu0 0
        %547 = vmatpush1.bf16.msra.mxu0 %v439
        %548 = vmatprep.subr.bf16.mxu0 0
        %549 = vmatpush1.bf16.msra.mxu0 %v440
        %550 = vmatprep.subr.bf16.mxu0 0
        %551 = vmatpush1.bf16.msra.mxu0 %v441
        %552 = vmatprep.subr.bf16.mxu0 0
        %553 = vmatpush1.bf16.msra.mxu0 %v480
        %554 = vmatprep.mubr.bf16.mxu0 %v476
        %555 = vmatmul.mubr.bf16.gmra.mrb[0].mxu0 %v213
        %v556 = vpop.f32.mrb[0].mxu0
        %v557 = vadd.f32 %v517, %v556
        %v558 = vpop.f32.mrb[0].mxu0
        %v559 = vpop.f32.mrb[0].mxu0
        %v560 = vpop.f32.mrb[0].mxu0
        %561 = vdwg.mxu0
        %vm562 = vcmask 80896
        %563 = vst.msk [vmem:[%s201] sm:$0xff] %vm562, %v557
        %s564 = sand.u32 %s97, 1
        %s565 = scalar_lea.sflag [#allocation4], %s564
        %s566 = sand.u32 %s97, 1
        %s567 = smul.addr %s566, 8
        %s568 = scalar_lea.vmem [#allocation7], %s567
        // Predicated region
        $region41: #{tpu_custom_call.1} parent=31 // pred_check
          %p569 = pneg %p107
        $region42: #{tpu_custom_call.1} parent=31 // pred_check_branch
          %571 = sbr.rel (%p569) target = $region44
        $region43: #{tpu_custom_call.1} parent=31 // pred_region
          %s573 = ssub.s32 128, 128
          %574 = vsyncadd %s565, %s573
          %s575 = smul.addr %s21, 128
          %s576 = scalar_lea.hbm %s3, %s575
          %s578 = sshll.u32 %s568, 4
          %s579 = int_to_ptr.vmem [resolvable:$true] %s578
          %581 = dma.vmem_to_hbm [thread:$0]  %s579, 128, %s576, %s565
        $region44: #{tpu_custom_call.1} parent=31 // pred_fallthru
          _
      $region32: #{tpu_custom_call.1} parent=5 // pred_fallthru
        _
      %p582 = scmp.le.s32.totalorder 2, %s16
      // Predicated region
      $region45: #{tpu_custom_call.1} parent=5 // pred_check
        %p583 = pneg %p582
      $region46: #{tpu_custom_call.1} parent=5 // pred_check_branch
        %585 = sbr.rel (%p583) target = $region48
      $region47: #{tpu_custom_call.1} parent=5 // pred_region
        %s586 = ssub.s32 %s16, 2
        // Predicated region
        $region49: #{tpu_custom_call.1} parent=47 // pred_check
          %p587 = pneg %p113
        $region50: #{tpu_custom_call.1} parent=47 // pred_check_branch
          %589 = sbr.rel (%p587) target = $region52
        $region51: #{tpu_custom_call.1} parent=47 // pred_region
          %s590 = sand.u32 %s98, 1
          %s591 = scalar_lea.sflag [#allocation4], %s590
          %s592 = sand.u32 %s98, 1
          %s593 = smul.addr %s592, 8
          %s594 = scalar_lea.vmem [#allocation7], %s593
          %595 = dma.done %s591, 128
        $region52: #{tpu_custom_call.1} parent=47 // pred_fallthru
          _
      $region48: #{tpu_custom_call.1} parent=5 // pred_fallthru
        _
    $region6: #{tpu_custom_call.1} parent=1 // loop_footer
      %s20 = sadd.s32 1, %s16
    $region7: #{tpu_custom_call.1} parent=1 // loop_footer_branch
      %15 = sbr.rel target = $region3
    $region8: #{tpu_custom_call.1} parent=1 // loop_exit
      _
    %596 = vsyncpa [#allocation3], 1
    %s597 = scalar_lea.sflag [#allocation3], 1
    %598 = vsyncpa %s597, 1
    %599 = vsyncpa [#allocation6], 1
    %600 = vsyncpa [#allocation4], 1
    %s601 = scalar_lea.sflag [#allocation4], 1
    %602 = vsyncpa %s601, 1

</llo_original>
